<compile_context>
chip_gen: v6e
topology: v6e:2x2x1
jax: 0.10.0
libtpu: 0.0.40
codegen_flags: <defaults>
</compile_context>

<pallas_src>
import functools

import jax
import jax.numpy as jnp
from jax import lax
from jax.experimental import pallas as pl
from jax.experimental.pallas import tpu as pltpu


def _round_up(n, m):
    return ((n + m - 1) // m) * m


def _vmem_capacity_bytes():
    """Best-effort per-core VMEM capacity; conservative fallback (v7x = 64 MiB)."""
    try:
        info = pltpu.get_tpu_info()
        for name in ("vmem_capacity_bytes", "vmem_bytes", "vmem_size_bytes"):
            v = getattr(info, name, None)
            if v:
                return int(v)
    except Exception:
        pass
    return 64 << 20


def _default_batch_tiles():
    """v7x has 2 TensorCores/chip -> split batch across them; 1 elsewhere."""
    try:
        kind = jax.devices()[0].device_kind.lower()
        if "v7" in kind:
            return 2
    except Exception:
        pass
    return 1


def _choose_t_chunk(T, t_max):
    """Largest divisor of T <= t_max (no padded time steps); fall back to t_max
    (caller pads T) only if the best divisor wastes >half the VMEM budget."""
    t_max = max(1, min(int(T), int(t_max)))
    best = 1
    for d in range(1, t_max + 1):
        if T % d == 0:
            best = d
    if 2 * best >= t_max:
        return best
    return t_max


def _recurrent_kernel(one_minus_alpha, t_chunk, unroll,
                      vin_ref, w_hbm_ref, h0_ref,
                      out_ref,
                      w_vmem, v_scratch, dma_sem):
    c = pl.program_id(1)            # time-chunk axis (innermost, sequential)

    # First time-chunk of each batch tile: copy the recurrent weight into its
    # single resident VMEM copy (no double buffering) and init the carried v.
    @pl.when(c == 0)
    def _():
        cp = pltpu.make_async_copy(w_hbm_ref, w_vmem, dma_sem)
        cp.start()
        v_scratch[...] = jnp.broadcast_to(h0_ref[...], v_scratch.shape)
        cp.wait()

    w_hid = w_vmem[...]             # hoisted load; resident across all chunks

    def step(i, v):
        # fr_t recomputed from v_t (relu is a free VPU op) -> only v is carried.
        fr = jnp.maximum(v, 0.0).astype(w_hid.dtype)
        v_new = (one_minus_alpha * v
                 + jnp.dot(fr, w_hid, preferred_element_type=jnp.float32)
                 + vin_ref[i])
        out_ref[i] = jnp.maximum(v_new, 0.0).astype(out_ref.dtype)
        return v_new

    v_scratch[...] = lax.fori_loop(0, t_chunk, step, v_scratch[...],
                                   unroll=unroll)


def recurrent_layer_forward(x, w_in, b_in, w_hid, b_hid, h0,
                            *, alpha=0.1,
                            t_chunk=None,
                            batch_tiles=None,
                            recurrent_weight_dtype=jnp.float32,  # bf16 on v6e/v7x if numerics allow
                            out_dtype=jnp.float32,               # bf16 halves states HBM/VMEM
                            input_precision=lax.Precision.HIGHEST):
    """x: (T, B, D_in) f32.  Returns states: (T, B, H) in out_dtype."""
    T, B, D_in = x.shape
    H = w_hid.shape[0]
    f32 = jnp.float32

    H_pad = _round_up(H, 128)       # lane tile
    if batch_tiles is None:
        batch_tiles = _default_batch_tiles()
    if batch_tiles > 1 and B > 8:
        B_pad = _round_up(B, 8 * batch_tiles)
    else:
        batch_tiles = 1
        B_pad = _round_up(B, 8)     # sublane tile
    b_tile = B_pad // batch_tiles

    # ---- VMEM-aware chunk sizing + explicit scoped-VMEM limit ----
    w_itemsize = jnp.dtype(recurrent_weight_dtype).itemsize
    out_itemsize = jnp.dtype(out_dtype).itemsize
    weight_bytes = H_pad * H_pad * w_itemsize             # single VMEM copy
    state_bytes = b_tile * H_pad * 4                       # carried v
    h0_bytes = 2 * H_pad * 4
    per_step_bytes = b_tile * H_pad * (2 * 4 + 2 * out_itemsize)  # vin + out, 2x buffered
    slack = 4 << 20                                        # compiler-internal headroom

    vmem_cap = _vmem_capacity_bytes()
    budget = max(int(0.8 * vmem_cap), 16 << 20)
    t_max = max(1, (budget - weight_bytes - state_bytes - h0_bytes - slack)
                // per_step_bytes)
    t_max = min(t_max, 256)
    if t_chunk is None:
        t_chunk = _choose_t_chunk(T, t_max)
    t_chunk = max(1, min(int(t_chunk), T))
    T_pad = _round_up(T, t_chunk)
    n_chunks = T_pad // t_chunk
    unroll = int(min(t_chunk, 8))   # partial unroll: LLO visibility w/o vreg blowup

    vmem_limit = (weight_bytes + state_bytes + h0_bytes
                  + t_chunk * per_step_bytes + slack)
    vmem_limit = int(min(max(vmem_limit, 16 << 20), vmem_cap))

    # ---- Host-side input projection: one big MXU matmul, emitted directly in
    # the padded (T, B_pad, H_pad) layout (no extra slab pad copy). ----
    x_p = x.astype(f32)
    if B_pad != B:
        x_p = jnp.pad(x_p, ((0, 0), (0, B_pad - B), (0, 0)))
    w_in_p = jnp.zeros((H_pad, D_in), f32).at[:H].set(w_in.astype(f32))
    bias_p = jnp.zeros((H_pad,), f32).at[:H].set((b_in + b_hid).astype(f32))
    # vin[t] = alpha * (x[t] @ W_in^T + b_in + b_hid); alpha & biases folded in.
    vin = alpha * (jnp.dot(x_p.reshape(T * B_pad, D_in), w_in_p.T,
                           precision=input_precision)
                   + bias_p)
    vin = vin.reshape(T, B_pad, H_pad)
    if T_pad != T:
        vin = jnp.pad(vin, ((0, T_pad - T), (0, 0), (0, 0)))

    # Fold alpha into the (pre-transposed) recurrent weight.
    w_hid_p = jnp.zeros((H_pad, H_pad), f32).at[:H, :H].set(
        alpha * w_hid.T.astype(f32)).astype(recurrent_weight_dtype)
    h0_p = jnp.zeros((1, H_pad), f32).at[0, :H].set(jnp.asarray(h0, f32))

    kernel = functools.partial(_recurrent_kernel,
                               float(1.0 - alpha), int(t_chunk), unroll)

    grid_spec = pltpu.PrefetchScalarGridSpec(
        num_scalar_prefetch=0,
        grid=(batch_tiles, n_chunks),          # (parallel batch, serial time)
        in_specs=[
            # Precomputed input-projection slab: one time-chunk per grid step.
            pl.BlockSpec((t_chunk, b_tile, H_pad), lambda b, c: (c, b, 0)),
            # Recurrent weight stays in HBM; one manual DMA per batch tile.
            pl.BlockSpec(memory_space=pl.ANY),
            # h0 (used only on the first chunk of each batch tile).
            pl.BlockSpec((1, H_pad), lambda b, c: (0, 0)),
        ],
        out_specs=pl.BlockSpec((t_chunk, b_tile, H_pad), lambda b, c: (c, b, 0)),
        scratch_shapes=[
            pltpu.VMEM((H_pad, H_pad), recurrent_weight_dtype),  # resident W
            pltpu.VMEM((b_tile, H_pad), jnp.float32),            # carried v_t
            pltpu.SemaphoreType.DMA(()),
        ],
    )

    out_p = pl.pallas_call(
        kernel,
        out_shape=jax.ShapeDtypeStruct((T_pad, B_pad, H_pad), out_dtype),
        grid_spec=grid_spec,
        compiler_params=pltpu.CompilerParams(
            dimension_semantics=("parallel", "arbitrary"),
            vmem_limit_bytes=vmem_limit,
        ),
    )(vin, w_hid_p, h0_p)

    return out_p[:T, :B, :H]


def recurrent_layer_reference(x, w_in, b_in, w_hid, b_hid, h0, *, alpha=0.1):
    """Pure-JAX reference of the PyTorch forward pass."""
    T, B, _ = x.shape
    H = w_hid.shape[0]
    v = jnp.broadcast_to(h0[None, :], (B, H))
    fr = jnp.maximum(v, 0.0)
    states = []
    for t in range(T):
        v_in = jnp.dot(x[t], w_in.T, precision=lax.Precision.HIGHEST) + b_in
        v_hid = jnp.dot(fr, w_hid.T, precision=lax.Precision.HIGHEST) + b_hid
        v = (1.0 - alpha) * v + alpha * (v_hid + v_in)
        fr = jnp.maximum(v, 0.0)
        states.append(fr)
    return jnp.stack(states, axis=0)


if __name__ == "__main__":
    # Small shapes consistent with the module: x is (n_timesteps, batch, input_dim).
    T, B, D_IN, H = 8, 2, 16, 32
    ALPHA = 10.0 / 100.0   # dt / tau

    key = jax.random.PRNGKey(0)
    kx, kwi, kbi, kwh, kbh = jax.random.split(key, 5)

    x = jax.random.normal(kx, (T, B, D_IN), dtype=jnp.float32)
    # Deterministic synthetic parameters (PyTorch Linear shapes: (out, in)).
    w_in = jax.random.normal(kwi, (H, D_IN), dtype=jnp.float32) * 0.1
    b_in = jax.random.normal(kbi, (H,), dtype=jnp.float32) * 0.1
    w_hid = jax.random.normal(kwh, (H, H), dtype=jnp.float32) * 0.1
    b_hid = jax.random.normal(kbh, (H,), dtype=jnp.float32) * 0.1
    h0 = jnp.zeros((H,), dtype=jnp.float32)   # init_state='zero'

    out = recurrent_layer_forward(x, w_in, b_in, w_hid, b_hid, h0, alpha=ALPHA)
    out = jax.block_until_ready(out)

    ref = recurrent_layer_reference(x, w_in, b_in, w_hid, b_hid, h0, alpha=ALPHA)
    assert out.shape == (T, B, H), out.shape
    err = float(jnp.max(jnp.abs(out - ref)))
    assert jnp.allclose(out, ref, atol=1e-4, rtol=1e-4), err

    print("KERNEL_OK")
</pallas_src>

<mosaic_0001>
module attributes {stable_mosaic.version = 11 : i64} {
  func.func @_recurrent_kernel(%arg0: i32, %arg1: i32, %arg2: memref<8x8x128xf32, #tpu.memory_space<vmem>>, %arg3: memref<128x128xf32, #tpu.memory_space<any>>, %arg4: memref<1x128xf32, #tpu.memory_space<vmem>>, %arg5: memref<8x8x128xf32, #tpu.memory_space<vmem>>, %arg6: memref<128x128xf32, #tpu.memory_space<vmem>>, %arg7: memref<8x128xf32, #tpu.memory_space<vmem>>, %arg8: memref<!tpu.dma_semaphore, #tpu.memory_space<semaphore_mem>>) attributes {dimension_semantics = [#tpu.dimension_semantics<parallel>, #tpu.dimension_semantics<arbitrary>], iteration_bounds = array<i64: 1, 1>, scalar_prefetch = 0 : i64, scratch_operands = 3 : i64, tpu.core_type = #tpu.core_type<tc>, window_params = [{transform_indices = @transform_0, window_bounds = array<i64: 8, 8, 128>}, {}, {pipeline_mode = #tpu.pipeline_mode<synchronous>, transform_indices = @transform_2, window_bounds = array<i64: 1, 128>}, {transform_indices = @transform_3, window_bounds = array<i64: 8, 8, 128>}]} {
    %c0_i32 = arith.constant 0 : i32
    %0 = arith.cmpi eq, %arg1, %c0_i32 : i32
    %1 = arith.extui %0 : i1 to i32
    %c0_i32_0 = arith.constant 0 : i32
    %2 = arith.cmpi ne, %1, %c0_i32_0 : i32
    scf.if %2 {
      tpu.enqueue_dma source(%arg3 : memref<128x128xf32, #tpu.memory_space<any>>) target(%arg6 : memref<128x128xf32, #tpu.memory_space<vmem>>) target_semaphore(%arg8 : memref<!tpu.dma_semaphore, #tpu.memory_space<semaphore_mem>>)
      %c0_70 = arith.constant 0 : index
      %c0_71 = arith.constant 0 : index
      %134 = vector.load %arg4[%c0_70, %c0_71] : memref<1x128xf32, #tpu.memory_space<vmem>>, vector<1x128xf32>
      %135 = vector.shape_cast %134 : vector<1x128xf32> to vector<1x128xf32>
      %136 = vector.broadcast %135 : vector<1x128xf32> to vector<8x128xf32>
      %c0_72 = arith.constant 0 : index
      %c0_73 = arith.constant 0 : index
      %137 = vector.load %arg7[%c0_72, %c0_73] : memref<8x128xf32, #tpu.memory_space<vmem>>, vector<8x128xf32>
      tpu.vector_store %arg7[%c0_72, %c0_73], %136 {strides = array<i32>} : memref<8x128xf32, #tpu.memory_space<vmem>>, vector<8x128xf32>,
      tpu.wait_dma2 semaphore(%arg8 : memref<!tpu.dma_semaphore, #tpu.memory_space<semaphore_mem>>) src(%arg3 : memref<128x128xf32, #tpu.memory_space<any>>) dst(%arg6 : memref<128x128xf32, #tpu.memory_space<vmem>>)
    } else {
    }
    %c0 = arith.constant 0 : index
    %c0_1 = arith.constant 0 : index
    %3 = vector.load %arg6[%c0, %c0_1] : memref<128x128xf32, #tpu.memory_space<vmem>>, vector<128x128xf32>
    %c0_2 = arith.constant 0 : index
    %c0_3 = arith.constant 0 : index
    %4 = vector.load %arg7[%c0_2, %c0_3] : memref<8x128xf32, #tpu.memory_space<vmem>>, vector<8x128xf32>
    %c0_i32_4 = arith.constant 0 : i32
    %cst = arith.constant 0.000000e+00 : f32
    %5 = vector.broadcast %cst : f32 to vector<8x128xf32>
    %6 = arith.maximumf %4, %5 : vector<8x128xf32>
    %cst_5 = arith.constant 0.899999976 : f32
    %7 = vector.broadcast %cst_5 : f32 to vector<8x128xf32>
    %8 = arith.mulf %7, %4 : vector<8x128xf32>
    %cst_6 = arith.constant dense<0.000000e+00> : vector<8x128xf32>
    %9 = tpu.matmul %6, %3, %cst_6 {dimension_numbers = #tpu.dot_dimension_numbers<[1], [0], [0], [1], [0, 0, 1, 1], [], []>} : vector<8x128xf32>, vector<128x128xf32>, vector<8x128xf32> -> vector<8x128xf32>
    %10 = arith.addf %8, %9 : vector<8x128xf32>
    %11 = arith.index_cast %c0_i32_4 : i32 to index
    %c0_7 = arith.constant 0 : index
    %c0_8 = arith.constant 0 : index
    %12 = vector.load %arg2[%11, %c0_7, %c0_8] : memref<8x8x128xf32, #tpu.memory_space<vmem>>, vector<1x8x128xf32>
    %13 = vector.shape_cast %12 : vector<1x8x128xf32> to vector<8x128xf32>
    %14 = arith.addf %10, %13 : vector<8x128xf32>
    %cst_9 = arith.constant 0.000000e+00 : f32
    %15 = vector.broadcast %cst_9 : f32 to vector<8x128xf32>
    %16 = arith.maximumf %14, %15 : vector<8x128xf32>
    %17 = arith.index_cast %c0_i32_4 : i32 to index
    %c0_10 = arith.constant 0 : index
    %c0_11 = arith.constant 0 : index
    %18 = vector.load %arg5[%17, %c0_10, %c0_11] : memref<8x8x128xf32, #tpu.memory_space<vmem>>, vector<1x8x128xf32>
    %19 = vector.shape_cast %18 : vector<1x8x128xf32> to vector<8x128xf32>
    %20 = vector.shape_cast %16 : vector<8x128xf32> to vector<1x8x128xf32>
    tpu.vector_store %arg5[%17, %c0_10, %c0_11], %20 {strides = array<i32>} : memref<8x8x128xf32, #tpu.memory_space<vmem>>, vector<1x8x128xf32>,
    %c1_i32 = arith.constant 1 : i32
    %cst_12 = arith.constant 0.000000e+00 : f32
    %21 = vector.broadcast %cst_12 : f32 to vector<8x128xf32>
    %22 = arith.maximumf %14, %21 : vector<8x128xf32>
    %cst_13 = arith.constant 0.899999976 : f32
    %23 = vector.broadcast %cst_13 : f32 to vector<8x128xf32>
    %24 = arith.mulf %23, %14 : vector<8x128xf32>
    %cst_14 = arith.constant dense<0.000000e+00> : vector<8x128xf32>
    %25 = tpu.matmul %22, %3, %cst_14 {dimension_numbers = #tpu.dot_dimension_numbers<[1], [0], [0], [1], [0, 0, 1, 1], [], []>} : vector<8x128xf32>, vector<128x128xf32>, vector<8x128xf32> -> vector<8x128xf32>
    %26 = arith.addf %24, %25 : vector<8x128xf32>
    %27 = arith.index_cast %c1_i32 : i32 to index
    %c0_15 = arith.constant 0 : index
    %c0_16 = arith.constant 0 : index
    %28 = vector.load %arg2[%27, %c0_15, %c0_16] : memref<8x8x128xf32, #tpu.memory_space<vmem>>, vector<1x8x128xf32>
    %29 = vector.shape_cast %28 : vector<1x8x128xf32> to vector<8x128xf32>
    %30 = arith.addf %26, %29 : vector<8x128xf32>
    %cst_17 = arith.constant 0.000000e+00 : f32
    %31 = vector.broadcast %cst_17 : f32 to vector<8x128xf32>
    %32 = arith.maximumf %30, %31 : vector<8x128xf32>
    %33 = arith.index_cast %c1_i32 : i32 to index
    %c0_18 = arith.constant 0 : index
    %c0_19 = arith.constant 0 : index
    %34 = vector.load %arg5[%33, %c0_18, %c0_19] : memref<8x8x128xf32, #tpu.memory_space<vmem>>, vector<1x8x128xf32>
    %35 = vector.shape_cast %34 : vector<1x8x128xf32> to vector<8x128xf32>
    %36 = vector.shape_cast %32 : vector<8x128xf32> to vector<1x8x128xf32>
    tpu.vector_store %arg5[%33, %c0_18, %c0_19], %36 {strides = array<i32>} : memref<8x8x128xf32, #tpu.memory_space<vmem>>, vector<1x8x128xf32>,
    %c2_i32 = arith.constant 2 : i32
    %cst_20 = arith.constant 0.000000e+00 : f32
    %37 = vector.broadcast %cst_20 : f32 to vector<8x128xf32>
    %38 = arith.maximumf %30, %37 : vector<8x128xf32>
    %cst_21 = arith.constant 0.899999976 : f32
    %39 = vector.broadcast %cst_21 : f32 to vector<8x128xf32>
    %40 = arith.mulf %39, %30 : vector<8x128xf32>
    %cst_22 = arith.constant dense<0.000000e+00> : vector<8x128xf32>
    %41 = tpu.matmul %38, %3, %cst_22 {dimension_numbers = #tpu.dot_dimension_numbers<[1], [0], [0], [1], [0, 0, 1, 1], [], []>} : vector<8x128xf32>, vector<128x128xf32>, vector<8x128xf32> -> vector<8x128xf32>
    %42 = arith.addf %40, %41 : vector<8x128xf32>
    %43 = arith.index_cast %c2_i32 : i32 to index
    %c0_23 = arith.constant 0 : index
    %c0_24 = arith.constant 0 : index
    %44 = vector.load %arg2[%43, %c0_23, %c0_24] : memref<8x8x128xf32, #tpu.memory_space<vmem>>, vector<1x8x128xf32>
    %45 = vector.shape_cast %44 : vector<1x8x128xf32> to vector<8x128xf32>
    %46 = arith.addf %42, %45 : vector<8x128xf32>
    %cst_25 = arith.constant 0.000000e+00 : f32
    %47 = vector.broadcast %cst_25 : f32 to vector<8x128xf32>
    %48 = arith.maximumf %46, %47 : vector<8x128xf32>
    %49 = arith.index_cast %c2_i32 : i32 to index
    %c0_26 = arith.constant 0 : index
    %c0_27 = arith.constant 0 : index
    %50 = vector.load %arg5[%49, %c0_26, %c0_27] : memref<8x8x128xf32, #tpu.memory_space<vmem>>, vector<1x8x128xf32>
    %51 = vector.shape_cast %50 : vector<1x8x128xf32> to vector<8x128xf32>
    %52 = vector.shape_cast %48 : vector<8x128xf32> to vector<1x8x128xf32>
    tpu.vector_store %arg5[%49, %c0_26, %c0_27], %52 {strides = array<i32>} : memref<8x8x128xf32, #tpu.memory_space<vmem>>, vector<1x8x128xf32>,
    %c3_i32 = arith.constant 3 : i32
    %cst_28 = arith.constant 0.000000e+00 : f32
    %53 = vector.broadcast %cst_28 : f32 to vector<8x128xf32>
    %54 = arith.maximumf %46, %53 : vector<8x128xf32>
    %cst_29 = arith.constant 0.899999976 : f32
    %55 = vector.broadcast %cst_29 : f32 to vector<8x128xf32>
    %56 = arith.mulf %55, %46 : vector<8x128xf32>
    %cst_30 = arith.constant dense<0.000000e+00> : vector<8x128xf32>
    %57 = tpu.matmul %54, %3, %cst_30 {dimension_numbers = #tpu.dot_dimension_numbers<[1], [0], [0], [1], [0, 0, 1, 1], [], []>} : vector<8x128xf32>, vector<128x128xf32>, vector<8x128xf32> -> vector<8x128xf32>
    %58 = arith.addf %56, %57 : vector<8x128xf32>
    %59 = arith.index_cast %c3_i32 : i32 to index
    %c0_31 = arith.constant 0 : index
    %c0_32 = arith.constant 0 : index
    %60 = vector.load %arg2[%59, %c0_31, %c0_32] : memref<8x8x128xf32, #tpu.memory_space<vmem>>, vector<1x8x128xf32>
    %61 = vector.shape_cast %60 : vector<1x8x128xf32> to vector<8x128xf32>
    %62 = arith.addf %58, %61 : vector<8x128xf32>
    %cst_33 = arith.constant 0.000000e+00 : f32
    %63 = vector.broadcast %cst_33 : f32 to vector<8x128xf32>
    %64 = arith.maximumf %62, %63 : vector<8x128xf32>
    %65 = arith.index_cast %c3_i32 : i32 to index
    %c0_34 = arith.constant 0 : index
    %c0_35 = arith.constant 0 : index
    %66 = vector.load %arg5[%65, %c0_34, %c0_35] : memref<8x8x128xf32, #tpu.memory_space<vmem>>, vector<1x8x128xf32>
    %67 = vector.shape_cast %66 : vector<1x8x128xf32> to vector<8x128xf32>
    %68 = vector.shape_cast %64 : vector<8x128xf32> to vector<1x8x128xf32>
    tpu.vector_store %arg5[%65, %c0_34, %c0_35], %68 {strides = array<i32>} : memref<8x8x128xf32, #tpu.memory_space<vmem>>, vector<1x8x128xf32>,
    %c4_i32 = arith.constant 4 : i32
    %cst_36 = arith.constant 0.000000e+00 : f32
    %69 = vector.broadcast %cst_36 : f32 to vector<8x128xf32>
    %70 = arith.maximumf %62, %69 : vector<8x128xf32>
    %cst_37 = arith.constant 0.899999976 : f32
    %71 = vector.broadcast %cst_37 : f32 to vector<8x128xf32>
    %72 = arith.mulf %71, %62 : vector<8x128xf32>
    %cst_38 = arith.constant dense<0.000000e+00> : vector<8x128xf32>
    %73 = tpu.matmul %70, %3, %cst_38 {dimension_numbers = #tpu.dot_dimension_numbers<[1], [0], [0], [1], [0, 0, 1, 1], [], []>} : vector<8x128xf32>, vector<128x128xf32>, vector<8x128xf32> -> vector<8x128xf32>
    %74 = arith.addf %72, %73 : vector<8x128xf32>
    %75 = arith.index_cast %c4_i32 : i32 to index
    %c0_39 = arith.constant 0 : index
    %c0_40 = arith.constant 0 : index
    %76 = vector.load %arg2[%75, %c0_39, %c0_40] : memref<8x8x128xf32, #tpu.memory_space<vmem>>, vector<1x8x128xf32>
    %77 = vector.shape_cast %76 : vector<1x8x128xf32> to vector<8x128xf32>
    %78 = arith.addf %74, %77 : vector<8x128xf32>
    %cst_41 = arith.constant 0.000000e+00 : f32
    %79 = vector.broadcast %cst_41 : f32 to vector<8x128xf32>
    %80 = arith.maximumf %78, %79 : vector<8x128xf32>
    %81 = arith.index_cast %c4_i32 : i32 to index
    %c0_42 = arith.constant 0 : index
    %c0_43 = arith.constant 0 : index
    %82 = vector.load %arg5[%81, %c0_42, %c0_43] : memref<8x8x128xf32, #tpu.memory_space<vmem>>, vector<1x8x128xf32>
    %83 = vector.shape_cast %82 : vector<1x8x128xf32> to vector<8x128xf32>
    %84 = vector.shape_cast %80 : vector<8x128xf32> to vector<1x8x128xf32>
    tpu.vector_store %arg5[%81, %c0_42, %c0_43], %84 {strides = array<i32>} : memref<8x8x128xf32, #tpu.memory_space<vmem>>, vector<1x8x128xf32>,
    %c5_i32 = arith.constant 5 : i32
    %cst_44 = arith.constant 0.000000e+00 : f32
    %85 = vector.broadcast %cst_44 : f32 to vector<8x128xf32>
    %86 = arith.maximumf %78, %85 : vector<8x128xf32>
    %cst_45 = arith.constant 0.899999976 : f32
    %87 = vector.broadcast %cst_45 : f32 to vector<8x128xf32>
    %88 = arith.mulf %87, %78 : vector<8x128xf32>
    %cst_46 = arith.constant dense<0.000000e+00> : vector<8x128xf32>
    %89 = tpu.matmul %86, %3, %cst_46 {dimension_numbers = #tpu.dot_dimension_numbers<[1], [0], [0], [1], [0, 0, 1, 1], [], []>} : vector<8x128xf32>, vector<128x128xf32>, vector<8x128xf32> -> vector<8x128xf32>
    %90 = arith.addf %88, %89 : vector<8x128xf32>
    %91 = arith.index_cast %c5_i32 : i32 to index
    %c0_47 = arith.constant 0 : index
    %c0_48 = arith.constant 0 : index
    %92 = vector.load %arg2[%91, %c0_47, %c0_48] : memref<8x8x128xf32, #tpu.memory_space<vmem>>, vector<1x8x128xf32>
    %93 = vector.shape_cast %92 : vector<1x8x128xf32> to vector<8x128xf32>
    %94 = arith.addf %90, %93 : vector<8x128xf32>
    %cst_49 = arith.constant 0.000000e+00 : f32
    %95 = vector.broadcast %cst_49 : f32 to vector<8x128xf32>
    %96 = arith.maximumf %94, %95 : vector<8x128xf32>
    %97 = arith.index_cast %c5_i32 : i32 to index
    %c0_50 = arith.constant 0 : index
    %c0_51 = arith.constant 0 : index
    %98 = vector.load %arg5[%97, %c0_50, %c0_51] : memref<8x8x128xf32, #tpu.memory_space<vmem>>, vector<1x8x128xf32>
    %99 = vector.shape_cast %98 : vector<1x8x128xf32> to vector<8x128xf32>
    %100 = vector.shape_cast %96 : vector<8x128xf32> to vector<1x8x128xf32>
    tpu.vector_store %arg5[%97, %c0_50, %c0_51], %100 {strides = array<i32>} : memref<8x8x128xf32, #tpu.memory_space<vmem>>, vector<1x8x128xf32>,
    %c6_i32 = arith.constant 6 : i32
    %cst_52 = arith.constant 0.000000e+00 : f32
    %101 = vector.broadcast %cst_52 : f32 to vector<8x128xf32>
    %102 = arith.maximumf %94, %101 : vector<8x128xf32>
    %cst_53 = arith.constant 0.899999976 : f32
    %103 = vector.broadcast %cst_53 : f32 to vector<8x128xf32>
    %104 = arith.mulf %103, %94 : vector<8x128xf32>
    %cst_54 = arith.constant dense<0.000000e+00> : vector<8x128xf32>
    %105 = tpu.matmul %102, %3, %cst_54 {dimension_numbers = #tpu.dot_dimension_numbers<[1], [0], [0], [1], [0, 0, 1, 1], [], []>} : vector<8x128xf32>, vector<128x128xf32>, vector<8x128xf32> -> vector<8x128xf32>
    %106 = arith.addf %104, %105 : vector<8x128xf32>
    %107 = arith.index_cast %c6_i32 : i32 to index
    %c0_55 = arith.constant 0 : index
    %c0_56 = arith.constant 0 : index
    %108 = vector.load %arg2[%107, %c0_55, %c0_56] : memref<8x8x128xf32, #tpu.memory_space<vmem>>, vector<1x8x128xf32>
    %109 = vector.shape_cast %108 : vector<1x8x128xf32> to vector<8x128xf32>
    %110 = arith.addf %106, %109 : vector<8x128xf32>
    %cst_57 = arith.constant 0.000000e+00 : f32
    %111 = vector.broadcast %cst_57 : f32 to vector<8x128xf32>
    %112 = arith.maximumf %110, %111 : vector<8x128xf32>
    %113 = arith.index_cast %c6_i32 : i32 to index
    %c0_58 = arith.constant 0 : index
    %c0_59 = arith.constant 0 : index
    %114 = vector.load %arg5[%113, %c0_58, %c0_59] : memref<8x8x128xf32, #tpu.memory_space<vmem>>, vector<1x8x128xf32>
    %115 = vector.shape_cast %114 : vector<1x8x128xf32> to vector<8x128xf32>
    %116 = vector.shape_cast %112 : vector<8x128xf32> to vector<1x8x128xf32>
    tpu.vector_store %arg5[%113, %c0_58, %c0_59], %116 {strides = array<i32>} : memref<8x8x128xf32, #tpu.memory_space<vmem>>, vector<1x8x128xf32>,
    %c7_i32 = arith.constant 7 : i32
    %cst_60 = arith.constant 0.000000e+00 : f32
    %117 = vector.broadcast %cst_60 : f32 to vector<8x128xf32>
    %118 = arith.maximumf %110, %117 : vector<8x128xf32>
    %cst_61 = arith.constant 0.899999976 : f32
    %119 = vector.broadcast %cst_61 : f32 to vector<8x128xf32>
    %120 = arith.mulf %119, %110 : vector<8x128xf32>
    %cst_62 = arith.constant dense<0.000000e+00> : vector<8x128xf32>
    %121 = tpu.matmul %118, %3, %cst_62 {dimension_numbers = #tpu.dot_dimension_numbers<[1], [0], [0], [1], [0, 0, 1, 1], [], []>} : vector<8x128xf32>, vector<128x128xf32>, vector<8x128xf32> -> vector<8x128xf32>
    %122 = arith.addf %120, %121 : vector<8x128xf32>
    %123 = arith.index_cast %c7_i32 : i32 to index
    %c0_63 = arith.constant 0 : index
    %c0_64 = arith.constant 0 : index
    %124 = vector.load %arg2[%123, %c0_63, %c0_64] : memref<8x8x128xf32, #tpu.memory_space<vmem>>, vector<1x8x128xf32>
    %125 = vector.shape_cast %124 : vector<1x8x128xf32> to vector<8x128xf32>
    %126 = arith.addf %122, %125 : vector<8x128xf32>
    %cst_65 = arith.constant 0.000000e+00 : f32
    %127 = vector.broadcast %cst_65 : f32 to vector<8x128xf32>
    %128 = arith.maximumf %126, %127 : vector<8x128xf32>
    %129 = arith.index_cast %c7_i32 : i32 to index
    %c0_66 = arith.constant 0 : index
    %c0_67 = arith.constant 0 : index
    %130 = vector.load %arg5[%129, %c0_66, %c0_67] : memref<8x8x128xf32, #tpu.memory_space<vmem>>, vector<1x8x128xf32>
    %131 = vector.shape_cast %130 : vector<1x8x128xf32> to vector<8x128xf32>
    %132 = vector.shape_cast %128 : vector<8x128xf32> to vector<1x8x128xf32>
    tpu.vector_store %arg5[%129, %c0_66, %c0_67], %132 {strides = array<i32>} : memref<8x8x128xf32, #tpu.memory_space<vmem>>, vector<1x8x128xf32>,
    %c8_i32 = arith.constant 8 : i32
    %c0_68 = arith.constant 0 : index
    %c0_69 = arith.constant 0 : index
    %133 = vector.load %arg7[%c0_68, %c0_69] : memref<8x128xf32, #tpu.memory_space<vmem>>, vector<8x128xf32>
    tpu.vector_store %arg7[%c0_68, %c0_69], %126 {strides = array<i32>} : memref<8x128xf32, #tpu.memory_space<vmem>>, vector<8x128xf32>,
    return
  }
  func.func @transform_0(%arg0: i32, %arg1: i32) -> (i32, i32, i32) {
    %c0_i32 = arith.constant 0 : i32
    %c0_i32_0 = arith.constant 0 : i32
    return %arg1, %arg0, %c0_i32 : i32, i32, i32
  }
  func.func @transform_2(%arg0: i32, %arg1: i32) -> (i32, i32) {
    %c0_i32 = arith.constant 0 : i32
    %c0_i32_0 = arith.constant 0 : i32
    %c0_i32_1 = arith.constant 0 : i32
    return %c0_i32, %c0_i32_0 : i32, i32
  }
  func.func @transform_3(%arg0: i32, %arg1: i32) -> (i32, i32, i32) {
    %c0_i32 = arith.constant 0 : i32
    %c0_i32_0 = arith.constant 0 : i32
    return %arg1, %arg0, %c0_i32 : i32, i32, i32
  }
}

</mosaic_0001>

<llo_original>
// kernel: tpu_custom_call.1
$region0: #{tpu_custom_call.1}
  #allocation0 [shape = 'u32[]', space=smem, size = 0x4, offset = 0x4, fixed_abs, tag = 'smem constant byte address 0x4 - core index']
  #allocation1 [shape = 'u32[144,128]{1,0:T(1,128)}', space=vmem, size = 0x12000, scoped, tag = 'internal scratch']
  #allocation2 [shape = 'f32[128,128]{1,0:T(8,128)}', space=vmem, size = 0x10000, scoped, tag = 'scratch operand']
  #allocation3 [shape = 'f32[8,128]{1,0:T(8,128)}', space=vmem, size = 0x1000, scoped, tag = 'scratch operand']
  #allocation4 [shape = 's32[1]{0}', space=sflag, size = 0x4, scoped, tag = 'scratch operand']
  #allocation9 [shape = 's32[]', space=sflag, size = 0x4, offset = 0, fixed_abs, tag = 'sflag constant byte address 0x0 - dummy sync flag']
  #allocation10 [shape = 's32[]', space=sflag, size = 0x4, offset = 0, fixed_abs, tag = 'sflag constant byte address 0x0 - dummy sync flag']
  #allocation11 [shape = 'u32[]', space=smem, size = 0x4, offset = 0x44, fixed_abs, tag = 'smem constant byte address 0x44 - assertion arg 0']
  #allocation12 [shape = 'u32[]', space=smem, size = 0x4, offset = 0x48, fixed_abs, tag = 'smem constant byte address 0x48 - assertion arg 1']
  %s0 = inlined_call_operand.hbm [shape: f32[8,8,128], index: 0, kind: input, shape index: {}]
  %s1 = inlined_call_operand.hbm [shape: f32[128,128], index: 1, kind: input, shape index: {}]
  %s2 = inlined_call_operand.vmem [shape: f32[1,128], index: 2, kind: input, shape index: {}]
  %s3 = inlined_call_operand.hbm [shape: f32[8,8,128], index: 3, kind: output, shape index: {}]
  %s4 = sld [smem:[#allocation0]]
  $region30: #{tpu_custom_call.1} parent=0
    _
  %s6 = ssub.s32 1, %s4
  %s7 = scalar_select 0, %s6, %s4
  $region1: #{tpu_custom_call.1} parent=0
    #allocation5 [shape = 'u8[32768]{0}', space=vmem, size = 0x8000, scoped, tag = 'input window, operand 0, single buffered']
    #allocation6 [shape = 's32[1]{0}', space=sflag, size = 0x4, scoped, tag = 'scoped memory for tpu_custom_call.1']
    #allocation7 [shape = 's32[1]{0}', space=sflag, size = 0x4, scoped, tag = 'scoped memory for tpu_custom_call.1']
    #allocation8 [shape = 'u8[32768]{0}', space=vmem, size = 0x8000, scoped, tag = 'output window, operand 0, single buffered']
    %8 = vsyncpa [#allocation6], 0
    %9 = vsyncpa [#allocation7], 0
    // Predicated region
    $region2: #{tpu_custom_call.1} parent=1 // pred_check
      _
    $region3: #{tpu_custom_call.1} parent=1 // pred_check_branch
      %11 = sbr.rel (0) target = $region5
    $region4: #{tpu_custom_call.1} parent=1 // pred_region
      %s13 = ssub.s32 1024, 1024
      %14 = vsyncadd [#allocation6], %s13
      %s15 = sshll.u32 [#allocation5], 4
      %s16 = int_to_ptr.vmem [resolvable:$true] %s15
      %21 = dma.hbm_to_vmem [thread:$0]  %s0, 1024, %s16, [#allocation6], 128, 128, 8
    $region5: #{tpu_custom_call.1} parent=1 // pred_fallthru
      _
    // Predicated region
    $region6: #{tpu_custom_call.1} parent=1 // pred_check
      _
    $region7: #{tpu_custom_call.1} parent=1 // pred_check_branch
      %23 = sbr.rel (0) target = $region9
    $region8: #{tpu_custom_call.1} parent=1 // pred_region
      _
    $region9: #{tpu_custom_call.1} parent=1 // pred_fallthru
      _
    // Predicated region
    $region10: #{tpu_custom_call.1} parent=1 // pred_check
      _
    $region11: #{tpu_custom_call.1} parent=1 // pred_check_branch
      %25 = sbr.rel (0) target = $region13
    $region12: #{tpu_custom_call.1} parent=1 // pred_region
      %26 = dma.done [#allocation6], 1024
    $region13: #{tpu_custom_call.1} parent=1 // pred_fallthru
      _
    %p27 = scmp.eq.s32.totalorder 0, 0
    // Predicated region
    $region14: #{tpu_custom_call.1} parent=1 // pred_check
      %p28 = pneg %p27
    $region15: #{tpu_custom_call.1} parent=1 // pred_check_branch
      %30 = sbr.rel (%p28) target = $region17
    $region16: #{tpu_custom_call.1} parent=1 // pred_region
      // Predicated region
      $region18: #{tpu_custom_call.1} parent=16 // pred_check
        _
      $region19: #{tpu_custom_call.1} parent=16 // pred_check_branch
        %32 = sbr.rel target = $region21
      $region20: #{tpu_custom_call.1} parent=16 // pred_region
        %33 = sst [smem:[#allocation11]] [#allocation10]
        %34 = sst [smem:[#allocation12]] [#allocation9]
      $region21: #{tpu_custom_call.1} parent=16 // pred_fallthru
        _
      %36 = shalt.err (0)
      %s38 = sshll.u32 [#allocation2], 4
      %s39 = int_to_ptr.vmem [resolvable:$true] %s38
      %41 = dma.hbm_to_vmem [thread:$0]  %s1, 2048, %s39, [#allocation4]
      %v42 = vld [vmem:[%s2] sm:$0x1]
      %v44 = vlaneseq
      %v45 = vshrl.u32 %v44, 7
      %v46 = vsub.s32 0, %v45
      %v47 = vrot.slane %v42, %v46
      %49 = vst [vmem:[#allocation3] sm:$0xff] %v47
      %s50 = smul.u32 128, 1
      %s51 = sshll.u32 %s50, 4
      %52 = dma.done [#allocation4], %s51
    $region17: #{tpu_custom_call.1} parent=1 // pred_fallthru
      _
    %v53 = vld [vmem:[#allocation2] sm:$0xff]
    %v54 = vld [vmem:[#allocation2 + $0x8] sm:$0xff]
    %v55 = vld [vmem:[#allocation2 + $0x10] sm:$0xff]
    %v56 = vld [vmem:[#allocation2 + $0x18] sm:$0xff]
    %v57 = vld [vmem:[#allocation2 + $0x20] sm:$0xff]
    %v58 = vld [vmem:[#allocation2 + $0x28] sm:$0xff]
    %v59 = vld [vmem:[#allocation2 + $0x30] sm:$0xff]
    %v60 = vld [vmem:[#allocation2 + $0x38] sm:$0xff]
    %v61 = vld [vmem:[#allocation2 + $0x40] sm:$0xff]
    %v62 = vld [vmem:[#allocation2 + $0x48] sm:$0xff]
    %v63 = vld [vmem:[#allocation2 + $0x50] sm:$0xff]
    %v64 = vld [vmem:[#allocation2 + $0x58] sm:$0xff]
    %v65 = vld [vmem:[#allocation2 + $0x60] sm:$0xff]
    %v66 = vld [vmem:[#allocation2 + $0x68] sm:$0xff]
    %v67 = vld [vmem:[#allocation2 + $0x70] sm:$0xff]
    %v68 = vld [vmem:[#allocation2 + $0x78] sm:$0xff]
    %v69 = vld [vmem:[#allocation3] sm:$0xff]
    %v70 = vmax.f32 %v69, 0.0
    %v71 = vmul.f32 %v69, 0.9
    %72 = vmatprep.subr.mxu0 0.0
    %73 = vmatpush1.msra.mxu0 %v68
    %74 = vmatprep.subr.mxu0 0.0
    %75 = vmatpush1.msra.mxu0 %v67
    %76 = vmatprep.subr.mxu0 0.0
    %77 = vmatpush1.msra.mxu0 %v66
    %78 = vmatprep.subr.mxu0 0.0
    %79 = vmatpush1.msra.mxu0 %v65
    %80 = vmatprep.subr.mxu0 0.0
    %81 = vmatpush1.msra.mxu0 %v64
    %82 = vmatprep.subr.mxu0 0.0
    %83 = vmatpush1.msra.mxu0 %v63
    %84 = vmatprep.subr.mxu0 0.0
    %85 = vmatpush1.msra.mxu0 %v62
    %86 = vmatprep.subr.mxu0 0.0
    %87 = vmatpush1.msra.mxu0 %v61
    %88 = vmatprep.subr.mxu0 0.0
    %89 = vmatpush1.msra.mxu0 %v60
    %90 = vmatprep.subr.mxu0 0.0
    %91 = vmatpush1.msra.mxu0 %v59
    %92 = vmatprep.subr.mxu0 0.0
    %93 = vmatpush1.msra.mxu0 %v58
    %94 = vmatprep.subr.mxu0 0.0
    %95 = vmatpush1.msra.mxu0 %v57
    %96 = vmatprep.subr.mxu0 0.0
    %97 = vmatpush1.msra.mxu0 %v56
    %98 = vmatprep.subr.mxu0 0.0
    %99 = vmatpush1.msra.mxu0 %v55
    %100 = vmatprep.subr.mxu0 0.0
    %101 = vmatpush1.msra.mxu0 %v54
    %102 = vmatprep.subr.mxu0 0.0
    %103 = vmatpush1.msra.mxu0 %v53
    %104 = vmatprep.subr.mxu0 0.0
    %105 = vmatpush2.msra.mxu0 0.0
    %106 = vmatprep.subr.mxu0 0.0
    %107 = vmatpush2.msra.mxu0 0.0
    %108 = vmatprep.subr.mxu0 0.0
    %109 = vmatpush2.msra.mxu0 0.0
    %110 = vmatprep.subr.mxu0 0.0
    %111 = vmatpush2.msra.mxu0 0.0
    %112 = vmatprep.subr.mxu0 0.0
    %113 = vmatpush2.msra.mxu0 0.0
    %114 = vmatprep.subr.mxu0 0.0
    %115 = vmatpush2.msra.mxu0 0.0
    %116 = vmatprep.subr.mxu0 0.0
    %117 = vmatpush2.msra.mxu0 0.0
    %118 = vmatprep.subr.mxu0 0.0
    %119 = vmatpush2.msra.mxu0 0.0
    %120 = vmatprep.subr.mxu0 0.0
    %121 = vmatpush2.msra.mxu0 0.0
    %122 = vmatprep.subr.mxu0 0.0
    %123 = vmatpush2.msra.mxu0 0.0
    %124 = vmatprep.subr.mxu0 0.0
    %125 = vmatpush2.msra.mxu0 0.0
    %126 = vmatprep.subr.mxu0 0.0
    %127 = vmatpush2.msra.mxu0 0.0
    %128 = vmatprep.subr.mxu0 0.0
    %129 = vmatpush2.msra.mxu0 0.0
    %130 = vmatprep.subr.mxu0 0.0
    %131 = vmatpush2.msra.mxu0 0.0
    %132 = vmatprep.subr.mxu0 0.0
    %133 = vmatpush2.msra.mxu0 0.0
    %134 = vmatprep.subr.mxu0 0.0
    %135 = vmatpush2.msra.mxu0 0.0
    %136 = vmatprep.mubr.f32.mxu0 0.0
    %137 = vmatmul.mubr.f32.gmra.mxu0 %v70
    %v138 = vpop.f32.mrf.mxu0
    %v139 = vadd.f32 0.0, %v138
    %v140 = vpop.f32.mrf.mxu0
    %141 = vdwg.mxu0
    %v142 = vadd.f32 %v71, %v139
    %v143 = vld [vmem:[#allocation5] sm:$0xff]
    %v144 = vadd.f32 %v142, %v143
    %v145 = vmax.f32 %v144, 0.0
    %146 = vst [vmem:[#allocation8] sm:$0xff] %v145
    %v147 = vmul.f32 %v144, 0.9
    %148 = vmatprep.subr.mxu0 0.0
    %149 = vmatpush1.msra.mxu0 %v68
    %150 = vmatprep.subr.mxu0 0.0
    %151 = vmatpush1.msra.mxu0 %v67
    %152 = vmatprep.subr.mxu0 0.0
    %153 = vmatpush1.msra.mxu0 %v66
    %154 = vmatprep.subr.mxu0 0.0
    %155 = vmatpush1.msra.mxu0 %v65
    %156 = vmatprep.subr.mxu0 0.0
    %157 = vmatpush1.msra.mxu0 %v64
    %158 = vmatprep.subr.mxu0 0.0
    %159 = vmatpush1.msra.mxu0 %v63
    %160 = vmatprep.subr.mxu0 0.0
    %161 = vmatpush1.msra.mxu0 %v62
    %162 = vmatprep.subr.mxu0 0.0
    %163 = vmatpush1.msra.mxu0 %v61
    %164 = vmatprep.subr.mxu0 0.0
    %165 = vmatpush1.msra.mxu0 %v60
    %166 = vmatprep.subr.mxu0 0.0
    %167 = vmatpush1.msra.mxu0 %v59
    %168 = vmatprep.subr.mxu0 0.0
    %169 = vmatpush1.msra.mxu0 %v58
    %170 = vmatprep.subr.mxu0 0.0
    %171 = vmatpush1.msra.mxu0 %v57
    %172 = vmatprep.subr.mxu0 0.0
    %173 = vmatpush1.msra.mxu0 %v56
    %174 = vmatprep.subr.mxu0 0.0
    %175 = vmatpush1.msra.mxu0 %v55
    %176 = vmatprep.subr.mxu0 0.0
    %177 = vmatpush1.msra.mxu0 %v54
    %178 = vmatprep.subr.mxu0 0.0
    %179 = vmatpush1.msra.mxu0 %v53
    %180 = vmatprep.subr.mxu0 0.0
    %181 = vmatpush2.msra.mxu0 0.0
    %182 = vmatprep.subr.mxu0 0.0
    %183 = vmatpush2.msra.mxu0 0.0
    %184 = vmatprep.subr.mxu0 0.0
    %185 = vmatpush2.msra.mxu0 0.0
    %186 = vmatprep.subr.mxu0 0.0
    %187 = vmatpush2.msra.mxu0 0.0
    %188 = vmatprep.subr.mxu0 0.0
    %189 = vmatpush2.msra.mxu0 0.0
    %190 = vmatprep.subr.mxu0 0.0
    %191 = vmatpush2.msra.mxu0 0.0
    %192 = vmatprep.subr.mxu0 0.0
    %193 = vmatpush2.msra.mxu0 0.0
    %194 = vmatprep.subr.mxu0 0.0
    %195 = vmatpush2.msra.mxu0 0.0
    %196 = vmatprep.subr.mxu0 0.0
    %197 = vmatpush2.msra.mxu0 0.0
    %198 = vmatprep.subr.mxu0 0.0
    %199 = vmatpush2.msra.mxu0 0.0
    %200 = vmatprep.subr.mxu0 0.0
    %201 = vmatpush2.msra.mxu0 0.0
    %202 = vmatprep.subr.mxu0 0.0
    %203 = vmatpush2.msra.mxu0 0.0
    %204 = vmatprep.subr.mxu0 0.0
    %205 = vmatpush2.msra.mxu0 0.0
    %206 = vmatprep.subr.mxu0 0.0
    %207 = vmatpush2.msra.mxu0 0.0
    %208 = vmatprep.subr.mxu0 0.0
    %209 = vmatpush2.msra.mxu0 0.0
    %210 = vmatprep.subr.mxu0 0.0
    %211 = vmatpush2.msra.mxu0 0.0
    %212 = vmatprep.mubr.f32.mxu0 0.0
    %213 = vmatmul.mubr.f32.gmra.mxu0 %v145
    %v214 = vpop.f32.mrf.mxu0
    %v215 = vadd.f32 0.0, %v214
    %v216 = vpop.f32.mrf.mxu0
    %217 = vdwg.mxu0
    %v218 = vadd.f32 %v147, %v215
    %s219 = scalar_lea.vmem [#allocation5], 8
    %v220 = vld [vmem:[%s219] sm:$0xff]
    %v221 = vadd.f32 %v218, %v220
    %v222 = vmax.f32 %v221, 0.0
    %s223 = scalar_lea.vmem [#allocation8], 8
    %224 = vst [vmem:[%s223] sm:$0xff] %v222
    %v225 = vmul.f32 %v221, 0.9
    %226 = vmatprep.subr.mxu0 0.0
    %227 = vmatpush1.msra.mxu0 %v68
    %228 = vmatprep.subr.mxu0 0.0
    %229 = vmatpush1.msra.mxu0 %v67
    %230 = vmatprep.subr.mxu0 0.0
    %231 = vmatpush1.msra.mxu0 %v66
    %232 = vmatprep.subr.mxu0 0.0
    %233 = vmatpush1.msra.mxu0 %v65
    %234 = vmatprep.subr.mxu0 0.0
    %235 = vmatpush1.msra.mxu0 %v64
    %236 = vmatprep.subr.mxu0 0.0
    %237 = vmatpush1.msra.mxu0 %v63
    %238 = vmatprep.subr.mxu0 0.0
    %239 = vmatpush1.msra.mxu0 %v62
    %240 = vmatprep.subr.mxu0 0.0
    %241 = vmatpush1.msra.mxu0 %v61
    %242 = vmatprep.subr.mxu0 0.0
    %243 = vmatpush1.msra.mxu0 %v60
    %244 = vmatprep.subr.mxu0 0.0
    %245 = vmatpush1.msra.mxu0 %v59
    %246 = vmatprep.subr.mxu0 0.0
    %247 = vmatpush1.msra.mxu0 %v58
    %248 = vmatprep.subr.mxu0 0.0
    %249 = vmatpush1.msra.mxu0 %v57
    %250 = vmatprep.subr.mxu0 0.0
    %251 = vmatpush1.msra.mxu0 %v56
    %252 = vmatprep.subr.mxu0 0.0
    %253 = vmatpush1.msra.mxu0 %v55
    %254 = vmatprep.subr.mxu0 0.0
    %255 = vmatpush1.msra.mxu0 %v54
    %256 = vmatprep.subr.mxu0 0.0
    %257 = vmatpush1.msra.mxu0 %v53
    %258 = vmatprep.subr.mxu0 0.0
    %259 = vmatpush2.msra.mxu0 0.0
    %260 = vmatprep.subr.mxu0 0.0
    %261 = vmatpush2.msra.mxu0 0.0
    %262 = vmatprep.subr.mxu0 0.0
    %263 = vmatpush2.msra.mxu0 0.0
    %264 = vmatprep.subr.mxu0 0.0
    %265 = vmatpush2.msra.mxu0 0.0
    %266 = vmatprep.subr.mxu0 0.0
    %267 = vmatpush2.msra.mxu0 0.0
    %268 = vmatprep.subr.mxu0 0.0
    %269 = vmatpush2.msra.mxu0 0.0
    %270 = vmatprep.subr.mxu0 0.0
    %271 = vmatpush2.msra.mxu0 0.0
    %272 = vmatprep.subr.mxu0 0.0
    %273 = vmatpush2.msra.mxu0 0.0
    %274 = vmatprep.subr.mxu0 0.0
    %275 = vmatpush2.msra.mxu0 0.0
    %276 = vmatprep.subr.mxu0 0.0
    %277 = vmatpush2.msra.mxu0 0.0
    %278 = vmatprep.subr.mxu0 0.0
    %279 = vmatpush2.msra.mxu0 0.0
    %280 = vmatprep.subr.mxu0 0.0
    %281 = vmatpush2.msra.mxu0 0.0
    %282 = vmatprep.subr.mxu0 0.0
    %283 = vmatpush2.msra.mxu0 0.0
    %284 = vmatprep.subr.mxu0 0.0
    %285 = vmatpush2.msra.mxu0 0.0
    %286 = vmatprep.subr.mxu0 0.0
    %287 = vmatpush2.msra.mxu0 0.0
    %288 = vmatprep.subr.mxu0 0.0
    %289 = vmatpush2.msra.mxu0 0.0
    %290 = vmatprep.mubr.f32.mxu0 0.0
    %291 = vmatmul.mubr.f32.gmra.mxu0 %v222
    %v292 = vpop.f32.mrf.mxu0
    %v293 = vadd.f32 0.0, %v292
    %v294 = vpop.f32.mrf.mxu0
    %295 = vdwg.mxu0
    %v296 = vadd.f32 %v225, %v293
    %s297 = scalar_lea.vmem [#allocation5], 16
    %v298 = vld [vmem:[%s297] sm:$0xff]
    %v299 = vadd.f32 %v296, %v298
    %v300 = vmax.f32 %v299, 0.0
    %s301 = scalar_lea.vmem [#allocation8], 16
    %302 = vst [vmem:[%s301] sm:$0xff] %v300
    %v303 = vmul.f32 %v299, 0.9
    %304 = vmatprep.subr.mxu0 0.0
    %305 = vmatpush1.msra.mxu0 %v68
    %306 = vmatprep.subr.mxu0 0.0
    %307 = vmatpush1.msra.mxu0 %v67
    %308 = vmatprep.subr.mxu0 0.0
    %309 = vmatpush1.msra.mxu0 %v66
    %310 = vmatprep.subr.mxu0 0.0
    %311 = vmatpush1.msra.mxu0 %v65
    %312 = vmatprep.subr.mxu0 0.0
    %313 = vmatpush1.msra.mxu0 %v64
    %314 = vmatprep.subr.mxu0 0.0
    %315 = vmatpush1.msra.mxu0 %v63
    %316 = vmatprep.subr.mxu0 0.0
    %317 = vmatpush1.msra.mxu0 %v62
    %318 = vmatprep.subr.mxu0 0.0
    %319 = vmatpush1.msra.mxu0 %v61
    %320 = vmatprep.subr.mxu0 0.0
    %321 = vmatpush1.msra.mxu0 %v60
    %322 = vmatprep.subr.mxu0 0.0
    %323 = vmatpush1.msra.mxu0 %v59
    %324 = vmatprep.subr.mxu0 0.0
    %325 = vmatpush1.msra.mxu0 %v58
    %326 = vmatprep.subr.mxu0 0.0
    %327 = vmatpush1.msra.mxu0 %v57
    %328 = vmatprep.subr.mxu0 0.0
    %329 = vmatpush1.msra.mxu0 %v56
    %330 = vmatprep.subr.mxu0 0.0
    %331 = vmatpush1.msra.mxu0 %v55
    %332 = vmatprep.subr.mxu0 0.0
    %333 = vmatpush1.msra.mxu0 %v54
    %334 = vmatprep.subr.mxu0 0.0
    %335 = vmatpush1.msra.mxu0 %v53
    %336 = vmatprep.subr.mxu0 0.0
    %337 = vmatpush2.msra.mxu0 0.0
    %338 = vmatprep.subr.mxu0 0.0
    %339 = vmatpush2.msra.mxu0 0.0
    %340 = vmatprep.subr.mxu0 0.0
    %341 = vmatpush2.msra.mxu0 0.0
    %342 = vmatprep.subr.mxu0 0.0
    %343 = vmatpush2.msra.mxu0 0.0
    %344 = vmatprep.subr.mxu0 0.0
    %345 = vmatpush2.msra.mxu0 0.0
    %346 = vmatprep.subr.mxu0 0.0
    %347 = vmatpush2.msra.mxu0 0.0
    %348 = vmatprep.subr.mxu0 0.0
    %349 = vmatpush2.msra.mxu0 0.0
    %350 = vmatprep.subr.mxu0 0.0
    %351 = vmatpush2.msra.mxu0 0.0
    %352 = vmatprep.subr.mxu0 0.0
    %353 = vmatpush2.msra.mxu0 0.0
    %354 = vmatprep.subr.mxu0 0.0
    %355 = vmatpush2.msra.mxu0 0.0
    %356 = vmatprep.subr.mxu0 0.0
    %357 = vmatpush2.msra.mxu0 0.0
    %358 = vmatprep.subr.mxu0 0.0
    %359 = vmatpush2.msra.mxu0 0.0
    %360 = vmatprep.subr.mxu0 0.0
    %361 = vmatpush2.msra.mxu0 0.0
    %362 = vmatprep.subr.mxu0 0.0
    %363 = vmatpush2.msra.mxu0 0.0
    %364 = vmatprep.subr.mxu0 0.0
    %365 = vmatpush2.msra.mxu0 0.0
    %366 = vmatprep.subr.mxu0 0.0
    %367 = vmatpush2.msra.mxu0 0.0
    %368 = vmatprep.mubr.f32.mxu0 0.0
    %369 = vmatmul.mubr.f32.gmra.mxu0 %v300
    %v370 = vpop.f32.mrf.mxu0
    %v371 = vadd.f32 0.0, %v370
    %v372 = vpop.f32.mrf.mxu0
    %373 = vdwg.mxu0
    %v374 = vadd.f32 %v303, %v371
    %s375 = scalar_lea.vmem [#allocation5], 24
    %v376 = vld [vmem:[%s375] sm:$0xff]
    %v377 = vadd.f32 %v374, %v376
    %v378 = vmax.f32 %v377, 0.0
    %s379 = scalar_lea.vmem [#allocation8], 24
    %380 = vst [vmem:[%s379] sm:$0xff] %v378
    %v381 = vmul.f32 %v377, 0.9
    %382 = vmatprep.subr.mxu0 0.0
    %383 = vmatpush1.msra.mxu0 %v68
    %384 = vmatprep.subr.mxu0 0.0
    %385 = vmatpush1.msra.mxu0 %v67
    %386 = vmatprep.subr.mxu0 0.0
    %387 = vmatpush1.msra.mxu0 %v66
    %388 = vmatprep.subr.mxu0 0.0
    %389 = vmatpush1.msra.mxu0 %v65
    %390 = vmatprep.subr.mxu0 0.0
    %391 = vmatpush1.msra.mxu0 %v64
    %392 = vmatprep.subr.mxu0 0.0
    %393 = vmatpush1.msra.mxu0 %v63
    %394 = vmatprep.subr.mxu0 0.0
    %395 = vmatpush1.msra.mxu0 %v62
    %396 = vmatprep.subr.mxu0 0.0
    %397 = vmatpush1.msra.mxu0 %v61
    %398 = vmatprep.subr.mxu0 0.0
    %399 = vmatpush1.msra.mxu0 %v60
    %400 = vmatprep.subr.mxu0 0.0
    %401 = vmatpush1.msra.mxu0 %v59
    %402 = vmatprep.subr.mxu0 0.0
    %403 = vmatpush1.msra.mxu0 %v58
    %404 = vmatprep.subr.mxu0 0.0
    %405 = vmatpush1.msra.mxu0 %v57
    %406 = vmatprep.subr.mxu0 0.0
    %407 = vmatpush1.msra.mxu0 %v56
    %408 = vmatprep.subr.mxu0 0.0
    %409 = vmatpush1.msra.mxu0 %v55
    %410 = vmatprep.subr.mxu0 0.0
    %411 = vmatpush1.msra.mxu0 %v54
    %412 = vmatprep.subr.mxu0 0.0
    %413 = vmatpush1.msra.mxu0 %v53
    %414 = vmatprep.subr.mxu0 0.0
    %415 = vmatpush2.msra.mxu0 0.0
    %416 = vmatprep.subr.mxu0 0.0
    %417 = vmatpush2.msra.mxu0 0.0
    %418 = vmatprep.subr.mxu0 0.0
    %419 = vmatpush2.msra.mxu0 0.0
    %420 = vmatprep.subr.mxu0 0.0
    %421 = vmatpush2.msra.mxu0 0.0
    %422 = vmatprep.subr.mxu0 0.0
    %423 = vmatpush2.msra.mxu0 0.0
    %424 = vmatprep.subr.mxu0 0.0
    %425 = vmatpush2.msra.mxu0 0.0
    %426 = vmatprep.subr.mxu0 0.0
    %427 = vmatpush2.msra.mxu0 0.0
    %428 = vmatprep.subr.mxu0 0.0
    %429 = vmatpush2.msra.mxu0 0.0
    %430 = vmatprep.subr.mxu0 0.0
    %431 = vmatpush2.msra.mxu0 0.0
    %432 = vmatprep.subr.mxu0 0.0
    %433 = vmatpush2.msra.mxu0 0.0
    %434 = vmatprep.subr.mxu0 0.0
    %435 = vmatpush2.msra.mxu0 0.0
    %436 = vmatprep.subr.mxu0 0.0
    %437 = vmatpush2.msra.mxu0 0.0
    %438 = vmatprep.subr.mxu0 0.0
    %439 = vmatpush2.msra.mxu0 0.0
    %440 = vmatprep.subr.mxu0 0.0
    %441 = vmatpush2.msra.mxu0 0.0
    %442 = vmatprep.subr.mxu0 0.0
    %443 = vmatpush2.msra.mxu0 0.0
    %444 = vmatprep.subr.mxu0 0.0
    %445 = vmatpush2.msra.mxu0 0.0
    %446 = vmatprep.mubr.f32.mxu0 0.0
    %447 = vmatmul.mubr.f32.gmra.mxu0 %v378
    %v448 = vpop.f32.mrf.mxu0
    %v449 = vadd.f32 0.0, %v448
    %v450 = vpop.f32.mrf.mxu0
    %451 = vdwg.mxu0
    %v452 = vadd.f32 %v381, %v449
    %s453 = scalar_lea.vmem [#allocation5], 32
    %v454 = vld [vmem:[%s453] sm:$0xff]
    %v455 = vadd.f32 %v452, %v454
    %v456 = vmax.f32 %v455, 0.0
    %s457 = scalar_lea.vmem [#allocation8], 32
    %458 = vst [vmem:[%s457] sm:$0xff] %v456
    %v459 = vmul.f32 %v455, 0.9
    %460 = vmatprep.subr.mxu0 0.0
    %461 = vmatpush1.msra.mxu0 %v68
    %462 = vmatprep.subr.mxu0 0.0
    %463 = vmatpush1.msra.mxu0 %v67
    %464 = vmatprep.subr.mxu0 0.0
    %465 = vmatpush1.msra.mxu0 %v66
    %466 = vmatprep.subr.mxu0 0.0
    %467 = vmatpush1.msra.mxu0 %v65
    %468 = vmatprep.subr.mxu0 0.0
    %469 = vmatpush1.msra.mxu0 %v64
    %470 = vmatprep.subr.mxu0 0.0
    %471 = vmatpush1.msra.mxu0 %v63
    %472 = vmatprep.subr.mxu0 0.0
    %473 = vmatpush1.msra.mxu0 %v62
    %474 = vmatprep.subr.mxu0 0.0
    %475 = vmatpush1.msra.mxu0 %v61
    %476 = vmatprep.subr.mxu0 0.0
    %477 = vmatpush1.msra.mxu0 %v60
    %478 = vmatprep.subr.mxu0 0.0
    %479 = vmatpush1.msra.mxu0 %v59
    %480 = vmatprep.subr.mxu0 0.0
    %481 = vmatpush1.msra.mxu0 %v58
    %482 = vmatprep.subr.mxu0 0.0
    %483 = vmatpush1.msra.mxu0 %v57
    %484 = vmatprep.subr.mxu0 0.0
    %485 = vmatpush1.msra.mxu0 %v56
    %486 = vmatprep.subr.mxu0 0.0
    %487 = vmatpush1.msra.mxu0 %v55
    %488 = vmatprep.subr.mxu0 0.0
    %489 = vmatpush1.msra.mxu0 %v54
    %490 = vmatprep.subr.mxu0 0.0
    %491 = vmatpush1.msra.mxu0 %v53
    %492 = vmatprep.subr.mxu0 0.0
    %493 = vmatpush2.msra.mxu0 0.0
    %494 = vmatprep.subr.mxu0 0.0
    %495 = vmatpush2.msra.mxu0 0.0
    %496 = vmatprep.subr.mxu0 0.0
    %497 = vmatpush2.msra.mxu0 0.0
    %498 = vmatprep.subr.mxu0 0.0
    %499 = vmatpush2.msra.mxu0 0.0
    %500 = vmatprep.subr.mxu0 0.0
    %501 = vmatpush2.msra.mxu0 0.0
    %502 = vmatprep.subr.mxu0 0.0
    %503 = vmatpush2.msra.mxu0 0.0
    %504 = vmatprep.subr.mxu0 0.0
    %505 = vmatpush2.msra.mxu0 0.0
    %506 = vmatprep.subr.mxu0 0.0
    %507 = vmatpush2.msra.mxu0 0.0
    %508 = vmatprep.subr.mxu0 0.0
    %509 = vmatpush2.msra.mxu0 0.0
    %510 = vmatprep.subr.mxu0 0.0
    %511 = vmatpush2.msra.mxu0 0.0
    %512 = vmatprep.subr.mxu0 0.0
    %513 = vmatpush2.msra.mxu0 0.0
    %514 = vmatprep.subr.mxu0 0.0
    %515 = vmatpush2.msra.mxu0 0.0
    %516 = vmatprep.subr.mxu0 0.0
    %517 = vmatpush2.msra.mxu0 0.0
    %518 = vmatprep.subr.mxu0 0.0
    %519 = vmatpush2.msra.mxu0 0.0
    %520 = vmatprep.subr.mxu0 0.0
    %521 = vmatpush2.msra.mxu0 0.0
    %522 = vmatprep.subr.mxu0 0.0
    %523 = vmatpush2.msra.mxu0 0.0
    %524 = vmatprep.mubr.f32.mxu0 0.0
    %525 = vmatmul.mubr.f32.gmra.mxu0 %v456
    %v526 = vpop.f32.mrf.mxu0
    %v527 = vadd.f32 0.0, %v526
    %v528 = vpop.f32.mrf.mxu0
    %529 = vdwg.mxu0
    %v530 = vadd.f32 %v459, %v527
    %s531 = scalar_lea.vmem [#allocation5], 40
    %v532 = vld [vmem:[%s531] sm:$0xff]
    %v533 = vadd.f32 %v530, %v532
    %v534 = vmax.f32 %v533, 0.0
    %s535 = scalar_lea.vmem [#allocation8], 40
    %536 = vst [vmem:[%s535] sm:$0xff] %v534
    %v537 = vmul.f32 %v533, 0.9
    %538 = vmatprep.subr.mxu0 0.0
    %539 = vmatpush1.msra.mxu0 %v68
    %540 = vmatprep.subr.mxu0 0.0
    %541 = vmatpush1.msra.mxu0 %v67
    %542 = vmatprep.subr.mxu0 0.0
    %543 = vmatpush1.msra.mxu0 %v66
    %544 = vmatprep.subr.mxu0 0.0
    %545 = vmatpush1.msra.mxu0 %v65
    %546 = vmatprep.subr.mxu0 0.0
    %547 = vmatpush1.msra.mxu0 %v64
    %548 = vmatprep.subr.mxu0 0.0
    %549 = vmatpush1.msra.mxu0 %v63
    %550 = vmatprep.subr.mxu0 0.0
    %551 = vmatpush1.msra.mxu0 %v62
    %552 = vmatprep.subr.mxu0 0.0
    %553 = vmatpush1.msra.mxu0 %v61
    %554 = vmatprep.subr.mxu0 0.0
    %555 = vmatpush1.msra.mxu0 %v60
    %556 = vmatprep.subr.mxu0 0.0
    %557 = vmatpush1.msra.mxu0 %v59
    %558 = vmatprep.subr.mxu0 0.0
    %559 = vmatpush1.msra.mxu0 %v58
    %560 = vmatprep.subr.mxu0 0.0
    %561 = vmatpush1.msra.mxu0 %v57
    %562 = vmatprep.subr.mxu0 0.0
    %563 = vmatpush1.msra.mxu0 %v56
    %564 = vmatprep.subr.mxu0 0.0
    %565 = vmatpush1.msra.mxu0 %v55
    %566 = vmatprep.subr.mxu0 0.0
    %567 = vmatpush1.msra.mxu0 %v54
    %568 = vmatprep.subr.mxu0 0.0
    %569 = vmatpush1.msra.mxu0 %v53
    %570 = vmatprep.subr.mxu0 0.0
    %571 = vmatpush2.msra.mxu0 0.0
    %572 = vmatprep.subr.mxu0 0.0
    %573 = vmatpush2.msra.mxu0 0.0
    %574 = vmatprep.subr.mxu0 0.0
    %575 = vmatpush2.msra.mxu0 0.0
    %576 = vmatprep.subr.mxu0 0.0
    %577 = vmatpush2.msra.mxu0 0.0
    %578 = vmatprep.subr.mxu0 0.0
    %579 = vmatpush2.msra.mxu0 0.0
    %580 = vmatprep.subr.mxu0 0.0
    %581 = vmatpush2.msra.mxu0 0.0
    %582 = vmatprep.subr.mxu0 0.0
    %583 = vmatpush2.msra.mxu0 0.0
    %584 = vmatprep.subr.mxu0 0.0
    %585 = vmatpush2.msra.mxu0 0.0
    %586 = vmatprep.subr.mxu0 0.0
    %587 = vmatpush2.msra.mxu0 0.0
    %588 = vmatprep.subr.mxu0 0.0
    %589 = vmatpush2.msra.mxu0 0.0
    %590 = vmatprep.subr.mxu0 0.0
    %591 = vmatpush2.msra.mxu0 0.0
    %592 = vmatprep.subr.mxu0 0.0
    %593 = vmatpush2.msra.mxu0 0.0
    %594 = vmatprep.subr.mxu0 0.0
    %595 = vmatpush2.msra.mxu0 0.0
    %596 = vmatprep.subr.mxu0 0.0
    %597 = vmatpush2.msra.mxu0 0.0
    %598 = vmatprep.subr.mxu0 0.0
    %599 = vmatpush2.msra.mxu0 0.0
    %600 = vmatprep.subr.mxu0 0.0
    %601 = vmatpush2.msra.mxu0 0.0
    %602 = vmatprep.mubr.f32.mxu0 0.0
    %603 = vmatmul.mubr.f32.gmra.mxu0 %v534
    %v604 = vpop.f32.mrf.mxu0
    %v605 = vadd.f32 0.0, %v604
    %v606 = vpop.f32.mrf.mxu0
    %607 = vdwg.mxu0
    %v608 = vadd.f32 %v537, %v605
    %s609 = scalar_lea.vmem [#allocation5], 48
    %v610 = vld [vmem:[%s609] sm:$0xff]
    %v611 = vadd.f32 %v608, %v610
    %v612 = vmax.f32 %v611, 0.0
    %s613 = scalar_lea.vmem [#allocation8], 48
    %614 = vst [vmem:[%s613] sm:$0xff] %v612
    %v615 = vmul.f32 %v611, 0.9
    %616 = vmatprep.subr.mxu0 0.0
    %617 = vmatpush1.msra.mxu0 %v68
    %618 = vmatprep.subr.mxu0 0.0
    %619 = vmatpush1.msra.mxu0 %v67
    %620 = vmatprep.subr.mxu0 0.0
    %621 = vmatpush1.msra.mxu0 %v66
    %622 = vmatprep.subr.mxu0 0.0
    %623 = vmatpush1.msra.mxu0 %v65
    %624 = vmatprep.subr.mxu0 0.0
    %625 = vmatpush1.msra.mxu0 %v64
    %626 = vmatprep.subr.mxu0 0.0
    %627 = vmatpush1.msra.mxu0 %v63
    %628 = vmatprep.subr.mxu0 0.0
    %629 = vmatpush1.msra.mxu0 %v62
    %630 = vmatprep.subr.mxu0 0.0
    %631 = vmatpush1.msra.mxu0 %v61
    %632 = vmatprep.subr.mxu0 0.0
    %633 = vmatpush1.msra.mxu0 %v60
    %634 = vmatprep.subr.mxu0 0.0
    %635 = vmatpush1.msra.mxu0 %v59
    %636 = vmatprep.subr.mxu0 0.0
    %637 = vmatpush1.msra.mxu0 %v58
    %638 = vmatprep.subr.mxu0 0.0
    %639 = vmatpush1.msra.mxu0 %v57
    %640 = vmatprep.subr.mxu0 0.0
    %641 = vmatpush1.msra.mxu0 %v56
    %642 = vmatprep.subr.mxu0 0.0
    %643 = vmatpush1.msra.mxu0 %v55
    %644 = vmatprep.subr.mxu0 0.0
    %645 = vmatpush1.msra.mxu0 %v54
    %646 = vmatprep.subr.mxu0 0.0
    %647 = vmatpush1.msra.mxu0 %v53
    %648 = vmatprep.subr.mxu0 0.0
    %649 = vmatpush2.msra.mxu0 0.0
    %650 = vmatprep.subr.mxu0 0.0
    %651 = vmatpush2.msra.mxu0 0.0
    %652 = vmatprep.subr.mxu0 0.0
    %653 = vmatpush2.msra.mxu0 0.0
    %654 = vmatprep.subr.mxu0 0.0
    %655 = vmatpush2.msra.mxu0 0.0
    %656 = vmatprep.subr.mxu0 0.0
    %657 = vmatpush2.msra.mxu0 0.0
    %658 = vmatprep.subr.mxu0 0.0
    %659 = vmatpush2.msra.mxu0 0.0
    %660 = vmatprep.subr.mxu0 0.0
    %661 = vmatpush2.msra.mxu0 0.0
    %662 = vmatprep.subr.mxu0 0.0
    %663 = vmatpush2.msra.mxu0 0.0
    %664 = vmatprep.subr.mxu0 0.0
    %665 = vmatpush2.msra.mxu0 0.0
    %666 = vmatprep.subr.mxu0 0.0
    %667 = vmatpush2.msra.mxu0 0.0
    %668 = vmatprep.subr.mxu0 0.0
    %669 = vmatpush2.msra.mxu0 0.0
    %670 = vmatprep.subr.mxu0 0.0
    %671 = vmatpush2.msra.mxu0 0.0
    %672 = vmatprep.subr.mxu0 0.0
    %673 = vmatpush2.msra.mxu0 0.0
    %674 = vmatprep.subr.mxu0 0.0
    %675 = vmatpush2.msra.mxu0 0.0
    %676 = vmatprep.subr.mxu0 0.0
    %677 = vmatpush2.msra.mxu0 0.0
    %678 = vmatprep.subr.mxu0 0.0
    %679 = vmatpush2.msra.mxu0 0.0
    %680 = vmatprep.mubr.f32.mxu0 0.0
    %681 = vmatmul.mubr.f32.gmra.mxu0 %v612
    %v682 = vpop.f32.mrf.mxu0
    %v683 = vadd.f32 0.0, %v682
    %v684 = vpop.f32.mrf.mxu0
    %685 = vdwg.mxu0
    %v686 = vadd.f32 %v615, %v683
    %s687 = scalar_lea.vmem [#allocation5], 56
    %v688 = vld [vmem:[%s687] sm:$0xff]
    %v689 = vadd.f32 %v686, %v688
    %v690 = vmax.f32 %v689, 0.0
    %s691 = scalar_lea.vmem [#allocation8], 56
    %692 = vst [vmem:[%s691] sm:$0xff] %v690
    %693 = vst [vmem:[#allocation3] sm:$0xff] %v689
    // Predicated region
    $region22: #{tpu_custom_call.1} parent=1 // pred_check
      _
    $region23: #{tpu_custom_call.1} parent=1 // pred_check_branch
      %695 = sbr.rel (0) target = $region25
    $region24: #{tpu_custom_call.1} parent=1 // pred_region
      %s697 = ssub.s32 1024, 1024
      %698 = vsyncadd [#allocation7], %s697
      %s699 = sshll.u32 [#allocation8], 4
      %s700 = int_to_ptr.vmem [resolvable:$true] %s699
      %705 = dma.vmem_to_hbm [thread:$0]  %s700, 1024, %s3, [#allocation7], 128, 128, 8
    $region25: #{tpu_custom_call.1} parent=1 // pred_fallthru
      _
    // Predicated region
    $region26: #{tpu_custom_call.1} parent=1 // pred_check
      _
    $region27: #{tpu_custom_call.1} parent=1 // pred_check_branch
      %707 = sbr.rel (0) target = $region29
    $region28: #{tpu_custom_call.1} parent=1 // pred_region
      %708 = dma.done [#allocation7], 1024
    $region29: #{tpu_custom_call.1} parent=1 // pred_fallthru
      _
    %709 = vsyncpa [#allocation6], 1
    %710 = vsyncpa [#allocation7], 1
  %711 = vsyncmov [#allocation4]
  %s712 = vpop.sfrf %711
  %p713 = scmp.eq.s32.totalorder %s712, 0
  %p714 = pneg %p713
  %716 = shalt.err (%p714)

</llo_original>
